<compile_context>
chip_gen: v5e
topology: v5e:2x2
jax: 0.10.0
libtpu: 0.0.40
codegen_flags: <defaults>
</compile_context>

<pallas_src>
import numpy as np
import jax
import jax.numpy as jnp
from jax.experimental import pallas as pl
from jax.experimental.pallas import tpu as pltpu

# ----------------------------- configuration -------------------------------
HEIGHT, WIDTH = 28, 28
INPUT_DIM = 4              # latent dim (and channel count after the reshape)
OUTPUT_DIM = 1             # image channels
HIDDEN_DIMS = [8, 8]       # hidden_dims[1] = channels between the two convT layers
STRIDES = [[2, 2], [2, 2]]
CONV_KERNELS = [[3, 3], [3, 3]]
BN_EPS = 1e-5

H0 = HEIGHT // (STRIDES[0][0] * STRIDES[1][0])   # 7
W0 = WIDTH // (STRIDES[0][1] * STRIDES[1][1])    # 7
H1, W1 = 2 * H0, 2 * W0                          # 14, 14 (after ConvT #1)
HP = H1 + 1                                      # 15 : right/bottom zero-padded grid
P2 = HP * HP                                     # 225: flattened padded pixels / sample
PW = 256                                         # lane width (>= P2 + max tap offset 16)
C1 = HIDDEN_DIMS[1]                              # 8
TAPW = 384                                       # scratch lane width (>= PW + 16, mult of 128)

_VMEM = pl.BlockSpec(memory_space=pltpu.MemorySpace.VMEM)


# ------------------------------ fused Pallas kernel -------------------------
def _decoder_kernel(zp_ref, w1_ref, consts_ref, out_ref, a_scr):
    BC = zp_ref.shape[0]          # B * C1
    batch = BC // C1
    inv_n = 1.0 / float(batch * H1 * W1)

    # ---- packed constants (static ref slices are cheap) ----
    sel = consts_ref[0:BC, 0:BC]                       # (BC, BC) per-channel batch aggregation
    gamma = consts_ref[0:BC, BC:BC + 1]                # (BC, 1)  gamma tiled per (b, c) row
    beta = consts_ref[0:BC, BC + 1:BC + 2]             # (BC, 1)
    b2 = consts_ref[0:1, BC + 2:BC + 3]                # (1, 1)   ConvT#2 bias
    k2 = consts_ref[BC:BC + 4 * batch, 0:4 * BC]       # (4B, 4*BC) batched sub-pixel weights
    maskf = consts_ref[BC + 4 * batch:BC + 4 * batch + 1, :]   # (1, PW) valid-pixel mask

    # ---- layer 1: FC + reshape + ConvTranspose#1 folded into ONE channel-major matmul
    # zp is the block-diagonal expansion of z (+ identity bias columns); result rows are
    # (b*C1 + c), fully packed vregs, pad lanes are structural zeros.
    y1 = jnp.dot(zp_ref[...], w1_ref[...], preferred_element_type=jnp.float32)   # (BC, PW)

    # ---- BatchNorm2d (training-mode batch stats) + ReLU, vectorized over (b, c) ----
    # Pad lanes of y1 are exactly zero, so whole-row lane sums give exact partial sums.
    rs = jnp.sum(y1, axis=1, keepdims=True)            # (BC, 1)  sum x   per (b, c)
    rs2 = jnp.sum(y1 * y1, axis=1, keepdims=True)      # (BC, 1)  sum x^2 per (b, c)
    mom = jnp.dot(sel, jnp.concatenate([rs, rs2], axis=1),
                  preferred_element_type=jnp.float32) * inv_n                    # (BC, 2)
    mean = mom[:, 0:1]
    var = mom[:, 1:2] - mean * mean                    # biased (training-mode) variance
    scale = gamma * jax.lax.rsqrt(var + BN_EPS)        # (BC, 1) one vectorized rsqrt
    shift = beta - mean * scale
    act = jnp.maximum(y1 * scale + shift, 0.0) * maskf                           # (BC, PW)

    # ---- stage activation once (single unmasked, aligned store) for shifted tap reads
    a_scr[:, 0:PW] = act
    a_scr[:, PW:] = jnp.zeros((BC, TAPW - PW), jnp.float32)

    # ---- layer 2: ConvTranspose#2 (stride 2, k=3) as a sub-pixel conv: ONE matmul ----
    # tap t reads the padded activation at lane offset {0, 1, HP, HP+1}; all four views
    # for the whole batch feed a single (B*4, 4*B*C1) x (4*B*C1, PW) MXU matmul.
    taps = jnp.concatenate(
        [a_scr[:, off:off + PW] for off in (0, 1, HP, HP + 1)], axis=0)          # (4*BC, PW)
    logits = jnp.dot(k2, taps, preferred_element_type=jnp.float32) + b2          # (B*4, PW)

    # exact sigmoid via tanh: one EUP op per element, output strictly in [0, 1]
    out_ref[...] = 0.5 + 0.5 * jnp.tanh(0.5 * logits)                            # lane-dense


def decoder_forward(z, kparams):
    B = z.shape[0]
    eye = jnp.eye(C1, dtype=jnp.float32)
    # Block-diagonal expansion: zb[b*C1+c, d*C1+c'] = z[b, d] * delta(c, c'), plus C1
    # identity columns that carry the folded (FC-bias -> ConvT#1) constant rows of w1.
    zb = (z[:, None, :, None] * eye[None, :, None, :]).reshape(B * C1, INPUT_DIM * C1)
    zp = jnp.concatenate([zb, jnp.tile(eye, (B, 1))], axis=1)      # (B*C1, (D+1)*C1)

    phases = pl.pallas_call(
        _decoder_kernel,
        out_shape=jax.ShapeDtypeStruct((B * 4, PW), jnp.float32),
        in_specs=[_VMEM, _VMEM, _VMEM],
        out_specs=_VMEM,
        scratch_shapes=[pltpu.VMEM((B * C1, TAPW), jnp.float32)],
    )(zp, kparams["w1"], kparams["consts"])

    # depth-to-space: row b*4 + (eh*2+ew), col rp*HP+cp  ->  out[b, 0, 2r+eh, 2c+ew]
    # TODO(synk): the 2x2 interleaved (strided) store could live in the kernel; it is
    # left as a tiny XLA reshape/transpose on the ~8 KB lane-dense output.
    y = phases[:, :P2].reshape(B, 2, 2, HP, HP)[:, :, :, :H1, :W1]
    y = jnp.transpose(y, (0, 3, 1, 4, 2)).reshape(B, HEIGHT, WIDTH)
    return y[:, None, :, :]                                         # (B, 1, 28, 28)

    # NOTE (v7x scaling): for larger batches, add a grid axis over batch tiles with
    # dimension_semantics=("parallel",) so both TensorCores get work, compute the BN
    # batch statistics with a two-pass (stats + normalize) scheme, and budget block
    # sizes against v7x's 64 MiB VMEM (vs 128 MiB on v5e/v6e).  At B=2 the whole
    # working set is < 150 KB, so a single VMEM-resident invocation is optimal.


# --------------------- exact ConvTranspose2d reference ----------------------
def _convt2d_nhwc(x, w_torch, stride, kernel, pad, out_pad, bias=None):
    """PyTorch ConvTranspose2d semantics (NHWC activations, torch (Cin,Cout,kh,kw) weight):
    zero-insert by stride, pad by (k-1-p)/(k-1-p+op), correlate with flipped kernel."""
    B, H, W, Cin = x.shape
    sh, sw = stride
    kh, kw = kernel
    ph, pw = pad
    oph, opw = out_pad
    Hd, Wd = (H - 1) * sh + 1, (W - 1) * sw + 1
    xd = jnp.zeros((B, Hd, Wd, Cin), jnp.float32).at[:, ::sh, ::sw, :].set(x)
    xp = jnp.pad(xd, ((0, 0), (kh - 1 - ph, kh - 1 - ph + oph),
                      (kw - 1 - pw, kw - 1 - pw + opw), (0, 0)))
    Ho = (H - 1) * sh - 2 * ph + kh + oph
    Wo = (W - 1) * sw - 2 * pw + kw + opw
    wf = jnp.transpose(jnp.flip(w_torch, (2, 3)), (2, 3, 0, 1))     # (kh,kw,Cin,Cout)
    out = jnp.zeros((B, Ho, Wo, w_torch.shape[1]), jnp.float32)
    for i in range(kh):
        for j in range(kw):
            out = out + jnp.einsum('bhwc,cd->bhwd', xp[:, i:i + Ho, j:j + Wo, :], wf[i, j])
    if bias is not None:
        out = out + bias
    return out


def decoder_reference(z, tp):
    """Pure-JAX reference with the exact module forward semantics."""
    B = z.shape[0]
    x = z @ tp["fc_w"].T + tp["fc_b"]
    x = x.reshape(B, INPUT_DIM, H0, W0).transpose(0, 2, 3, 1)        # NCHW -> NHWC
    y1 = _convt2d_nhwc(x, tp["w1"], STRIDES[0], CONV_KERNELS[0], (1, 1), (1, 1), bias=tp["b1"])
    mean = jnp.mean(y1, axis=(0, 1, 2))
    var = jnp.mean((y1 - mean) ** 2, axis=(0, 1, 2))                 # biased (training mode)
    a1 = jnp.maximum((y1 - mean) * jax.lax.rsqrt(var + BN_EPS) * tp["gamma"] + tp["beta"], 0.0)
    y2 = _convt2d_nhwc(a1, tp["w2"], STRIDES[1], CONV_KERNELS[1], (1, 1), (1, 1), bias=tp["b2"])
    return jnp.transpose(jax.nn.sigmoid(y2), (0, 3, 1, 2))           # NCHW


# --------------------------- parameter folding ------------------------------
def fold_params(tp, batch):
    D = INPUT_DIM
    BC = batch * C1

    def fc_conv1(zz, with_fc_bias):
        x = zz @ tp["fc_w"].T
        if with_fc_bias:
            x = x + tp["fc_b"]
        x = x.reshape(zz.shape[0], D, H0, W0).transpose(0, 2, 3, 1)
        # ConvT#1 bias dropped on purpose: exactly cancelled by batch-stat BatchNorm.
        return _convt2d_nhwc(x, tp["w1"], STRIDES[0], CONV_KERNELS[0], (1, 1), (1, 1))

    def embed(y):  # (n, H1, W1, C1) -> (n, C1, PW): channel-major, zero-padded 15x15 layout
        n = y.shape[0]
        yp = jnp.zeros((n, HP, HP, C1), jnp.float32).at[:, :H1, :W1, :].set(y)
        yp = jnp.transpose(yp, (0, 3, 1, 2)).reshape(n, C1, P2)
        return jnp.pad(yp, ((0, 0), (0, 0), (0, PW - P2)))

    a1_w = embed(fc_conv1(jnp.eye(D, dtype=jnp.float32), False))      # (D, C1, PW)
    a1_c = embed(fc_conv1(jnp.zeros((1, D), jnp.float32), True))[0]   # (C1, PW)

    # Folded weight for matmul #1: rows d*C1+c (linear part), then C1 bias rows that
    # are selected by the identity columns appended to the z expansion in the wrapper.
    w1p = jnp.concatenate([a1_w.reshape(D * C1, PW), a1_c], axis=0)   # ((D+1)*C1, PW)

    # ConvT#2 as 4 output phases x 4 taps:  k2_old[eh*2+ew, (dr*2+dc)*C1 + c]
    wf2 = np.asarray(jnp.transpose(jnp.flip(tp["w2"], (2, 3)), (2, 3, 0, 1)))   # (3,3,C1,1)
    k2_old = np.zeros((4, 4 * C1), np.float32)
    for eh in range(2):
        for ew in range(2):
            for dr in range(2):
                for dc in range(2):
                    i, j = 2 * dr + 1 - eh, 2 * dc + 1 - ew
                    if 0 <= i < 3 and 0 <= j < 3:
                        k2_old[eh * 2 + ew,
                               (dr * 2 + dc) * C1:(dr * 2 + dc + 1) * C1] = wf2[i, j, :, 0]

    # Batched block-diagonal version matching taps = concat_t(activation shifted by off_t):
    #   k2_big[b*4 + phase, t*BC + b*C1 + c] = k2_old[phase, t*C1 + c]
    k2_big = np.zeros((4 * batch, 4 * BC), np.float32)
    for b in range(batch):
        for t in range(4):
            k2_big[b * 4:(b + 1) * 4,
                   t * BC + b * C1: t * BC + (b + 1) * C1] = k2_old[:, t * C1:(t + 1) * C1]

    mask = np.zeros((PW,), np.float32)                                # valid-pixel mask
    for rp in range(H1):
        mask[rp * HP: rp * HP + W1] = 1.0

    gamma = np.tile(np.asarray(tp["gamma"], np.float32), batch)       # row b*C1+c -> gamma[c]
    beta = np.tile(np.asarray(tp["beta"], np.float32), batch)

    # One packed constants tensor (single DMA):
    #   rows 0..BC-1 : cols 0..BC-1 selector (delta(c,c')), col BC gamma, col BC+1 beta,
    #                  col BC+2 (row 0) ConvT#2 bias
    #   rows BC..BC+4B-1 : ConvT#2 sub-pixel matrix (cols 0..4*BC-1)
    #   row  BC+4B       : valid-pixel mask (all PW lanes)
    consts = np.zeros((BC + 4 * batch + 1, PW), np.float32)
    consts[0:BC, 0:BC] = np.tile(np.eye(C1, dtype=np.float32), (batch, batch))
    consts[0:BC, BC] = gamma
    consts[0:BC, BC + 1] = beta
    consts[0, BC + 2] = float(np.asarray(tp["b2"]).reshape(-1)[0])
    consts[BC:BC + 4 * batch, 0:4 * BC] = k2_big
    consts[BC + 4 * batch, :] = mask

    return {
        "w1": jnp.asarray(w1p, jnp.float32),
        "consts": jnp.asarray(consts),
    }


def init_params(key, batch):
    ks = jax.random.split(key, 8)
    fc_out = INPUT_DIM * H0 * W0
    tp = {
        "fc_w": 0.1 * jax.random.normal(ks[0], (fc_out, INPUT_DIM), jnp.float32),   # (out, in)
        "fc_b": 0.1 * jax.random.normal(ks[1], (fc_out,), jnp.float32),
        "w1": 0.1 * jax.random.normal(ks[2], (INPUT_DIM, C1, 3, 3), jnp.float32),   # (Cin,Cout,kh,kw)
        "b1": 0.1 * jax.random.normal(ks[3], (C1,), jnp.float32),
        "w2": 0.1 * jax.random.normal(ks[4], (C1, OUTPUT_DIM, 3, 3), jnp.float32),
        "b2": 0.1 * jax.random.normal(ks[5], (OUTPUT_DIM,), jnp.float32),
        "gamma": 1.0 + 0.1 * jax.random.normal(ks[6], (C1,), jnp.float32),
        "beta": 0.1 * jax.random.normal(ks[7], (C1,), jnp.float32),
    }
    return tp, fold_params(tp, batch)


# --------------------------------- main --------------------------------------
if __name__ == "__main__":
    key = jax.random.PRNGKey(0)
    pkey, zkey = jax.random.split(key)

    B = 2
    torch_params, kernel_params = init_params(pkey, B)
    z = jax.random.normal(zkey, (B, INPUT_DIM), jnp.float32)

    fwd = jax.jit(lambda zz: decoder_forward(zz, kernel_params))
    out = jax.block_until_ready(fwd(z))

    assert out.shape == (B, OUTPUT_DIM, HEIGHT, WIDTH), out.shape
    assert bool(jnp.all(jnp.isfinite(out)))
    assert bool(jnp.all((out >= 0.0) & (out <= 1.0 + 1e-6)))          # exact sigmoid range

    ref = decoder_reference(z, torch_params)
    err = float(jnp.max(jnp.abs(out - ref)))
    assert err < 1e-3, f"mismatch vs pure-JAX reference: max|diff| = {err}"
    print("KERNEL_OK")
</pallas_src>

<mosaic_0001>
module attributes {stable_mosaic.version = 11 : i64} {
  func.func @_decoder_kernel(%arg0: memref<16x40xf32, #tpu.memory_space<vmem>>, %arg1: memref<40x256xf32, #tpu.memory_space<vmem>>, %arg2: memref<25x256xf32, #tpu.memory_space<vmem>>, %arg3: memref<8x256xf32, #tpu.memory_space<vmem>>, %arg4: memref<16x384xf32, #tpu.memory_space<vmem>>) attributes {dimension_semantics = [], scalar_prefetch = 0 : i64, scratch_operands = 1 : i64, tpu.core_type = #tpu.core_type<tc>} {
    %c0 = arith.constant 0 : index
    %c0_0 = arith.constant 0 : index
    %0 = vector.load %arg2[%c0, %c0_0] : memref<25x256xf32, #tpu.memory_space<vmem>>, vector<16x16xf32>
    %c0_1 = arith.constant 0 : index
    %c16 = arith.constant 16 : index
    %1 = vector.load %arg2[%c0_1, %c16] : memref<25x256xf32, #tpu.memory_space<vmem>>, vector<16x1xf32>
    %c0_2 = arith.constant 0 : index
    %c17 = arith.constant 17 : index
    %2 = vector.load %arg2[%c0_2, %c17] : memref<25x256xf32, #tpu.memory_space<vmem>>, vector<16x1xf32>
    %c0_3 = arith.constant 0 : index
    %c18 = arith.constant 18 : index
    %3 = vector.load %arg2[%c0_3, %c18] : memref<25x256xf32, #tpu.memory_space<vmem>>, vector<1x1xf32>
    %c16_4 = arith.constant 16 : index
    %c0_5 = arith.constant 0 : index
    %4 = vector.load %arg2[%c16_4, %c0_5] : memref<25x256xf32, #tpu.memory_space<vmem>>, vector<8x64xf32>
    %c24 = arith.constant 24 : index
    %c0_6 = arith.constant 0 : index
    %5 = vector.load %arg2[%c24, %c0_6] : memref<25x256xf32, #tpu.memory_space<vmem>>, vector<1x256xf32>
    %c0_7 = arith.constant 0 : index
    %c0_8 = arith.constant 0 : index
    %6 = vector.load %arg0[%c0_7, %c0_8] : memref<16x40xf32, #tpu.memory_space<vmem>>, vector<16x40xf32>
    %c0_9 = arith.constant 0 : index
    %c0_10 = arith.constant 0 : index
    %7 = vector.load %arg1[%c0_9, %c0_10] : memref<40x256xf32, #tpu.memory_space<vmem>>, vector<40x256xf32>
    %cst = arith.constant dense<0.000000e+00> : vector<16x256xf32>
    %8 = tpu.matmul %6, %7, %cst {dimension_numbers = #tpu.dot_dimension_numbers<[1], [0], [0], [1], [0, 0, 1, 1], [], []>} : vector<16x40xf32>, vector<40x256xf32>, vector<16x256xf32> -> vector<16x256xf32>
    %cst_11 = arith.constant dense<0.000000e+00> : vector<16xf32>
    %9 = vector.multi_reduction <add>, %8, %cst_11 [1] : vector<16x256xf32> to vector<16xf32>
    %10 = vector.shape_cast %9 : vector<16xf32> to vector<16x1xf32>
    %11 = arith.mulf %8, %8 : vector<16x256xf32>
    %cst_12 = arith.constant dense<0.000000e+00> : vector<16xf32>
    %12 = vector.multi_reduction <add>, %11, %cst_12 [1] : vector<16x256xf32> to vector<16xf32>
    %13 = vector.shape_cast %12 : vector<16xf32> to vector<16x1xf32>
    %14 = tpu.concatenate %10, %13 in 1 : vector<16x1xf32>, vector<16x1xf32> -> vector<16x2xf32>
    %cst_13 = arith.constant dense<0.000000e+00> : vector<16x2xf32>
    %15 = tpu.matmul %0, %14, %cst_13 {dimension_numbers = #tpu.dot_dimension_numbers<[1], [0], [0], [1], [0, 0, 1, 1], [], []>} : vector<16x16xf32>, vector<16x2xf32>, vector<16x2xf32> -> vector<16x2xf32>
    %cst_14 = arith.constant 0.00255102036 : f32
    %16 = vector.broadcast %cst_14 : f32 to vector<16x2xf32>
    %17 = arith.mulf %15, %16 : vector<16x2xf32>
    %18 = vector.extract_strided_slice %17 {offsets = [0, 0], sizes = [16, 1], strides = [1, 1]} : vector<16x2xf32> to vector<16x1xf32>
    %19 = vector.extract_strided_slice %17 {offsets = [0, 1], sizes = [16, 1], strides = [1, 1]} : vector<16x2xf32> to vector<16x1xf32>
    %20 = arith.mulf %18, %18 : vector<16x1xf32>
    %21 = arith.subf %19, %20 : vector<16x1xf32>
    %cst_15 = arith.constant 9.99999974E-6 : f32
    %22 = vector.broadcast %cst_15 : f32 to vector<16x1xf32>
    %23 = arith.addf %21, %22 : vector<16x1xf32>
    %24 = math.rsqrt %23 : vector<16x1xf32>
    %25 = arith.mulf %1, %24 : vector<16x1xf32>
    %26 = arith.mulf %18, %25 : vector<16x1xf32>
    %27 = arith.subf %2, %26 : vector<16x1xf32>
    %28 = vector.broadcast %25 : vector<16x1xf32> to vector<16x256xf32>
    %29 = arith.mulf %8, %28 : vector<16x256xf32>
    %30 = vector.broadcast %27 : vector<16x1xf32> to vector<16x256xf32>
    %31 = arith.addf %29, %30 : vector<16x256xf32>
    %cst_16 = arith.constant 0.000000e+00 : f32
    %32 = vector.broadcast %cst_16 : f32 to vector<16x256xf32>
    %33 = arith.maximumf %31, %32 : vector<16x256xf32>
    %34 = vector.broadcast %5 : vector<1x256xf32> to vector<16x256xf32>
    %35 = arith.mulf %33, %34 : vector<16x256xf32>
    %c0_17 = arith.constant 0 : index
    %c0_18 = arith.constant 0 : index
    %36 = vector.load %arg4[%c0_17, %c0_18] : memref<16x384xf32, #tpu.memory_space<vmem>>, vector<16x256xf32>
    tpu.vector_store %arg4[%c0_17, %c0_18], %35 {strides = array<i32>} : memref<16x384xf32, #tpu.memory_space<vmem>>, vector<16x256xf32>,
    %cst_19 = arith.constant 0.000000e+00 : f32
    %37 = vector.broadcast %cst_19 : f32 to vector<16x128xf32>
    %c0_20 = arith.constant 0 : index
    %c256 = arith.constant 256 : index
    %38 = vector.load %arg4[%c0_20, %c256] : memref<16x384xf32, #tpu.memory_space<vmem>>, vector<16x128xf32>
    tpu.vector_store %arg4[%c0_20, %c256], %37 {strides = array<i32>} : memref<16x384xf32, #tpu.memory_space<vmem>>, vector<16x128xf32>,
    %c0_21 = arith.constant 0 : index
    %c0_22 = arith.constant 0 : index
    %39 = vector.load %arg4[%c0_21, %c0_22] : memref<16x384xf32, #tpu.memory_space<vmem>>, vector<16x256xf32>
    %c0_23 = arith.constant 0 : index
    %c1 = arith.constant 1 : index
    %40 = vector.load %arg4[%c0_23, %c1] : memref<16x384xf32, #tpu.memory_space<vmem>>, vector<16x256xf32>
    %c0_24 = arith.constant 0 : index
    %c15 = arith.constant 15 : index
    %41 = vector.load %arg4[%c0_24, %c15] : memref<16x384xf32, #tpu.memory_space<vmem>>, vector<16x256xf32>
    %c0_25 = arith.constant 0 : index
    %c16_26 = arith.constant 16 : index
    %42 = vector.load %arg4[%c0_25, %c16_26] : memref<16x384xf32, #tpu.memory_space<vmem>>, vector<16x256xf32>
    %43 = tpu.concatenate %39, %40, %41, %42 in 0 : vector<16x256xf32>, vector<16x256xf32>, vector<16x256xf32>, vector<16x256xf32> -> vector<64x256xf32>
    %cst_27 = arith.constant dense<0.000000e+00> : vector<8x256xf32>
    %44 = tpu.matmul %4, %43, %cst_27 {dimension_numbers = #tpu.dot_dimension_numbers<[1], [0], [0], [1], [0, 0, 1, 1], [], []>} : vector<8x64xf32>, vector<64x256xf32>, vector<8x256xf32> -> vector<8x256xf32>
    %45 = vector.broadcast %3 : vector<1x1xf32> to vector<8x256xf32>
    %46 = arith.addf %44, %45 : vector<8x256xf32>
    %cst_28 = arith.constant 5.000000e-01 : f32
    %47 = vector.broadcast %cst_28 : f32 to vector<8x256xf32>
    %48 = arith.mulf %47, %46 : vector<8x256xf32>
    %49 = math.tanh %48 : vector<8x256xf32>
    %cst_29 = arith.constant 5.000000e-01 : f32
    %50 = vector.broadcast %cst_29 : f32 to vector<8x256xf32>
    %51 = arith.mulf %50, %49 : vector<8x256xf32>
    %cst_30 = arith.constant 5.000000e-01 : f32
    %52 = vector.broadcast %cst_30 : f32 to vector<8x256xf32>
    %53 = arith.addf %52, %51 : vector<8x256xf32>
    %c0_31 = arith.constant 0 : index
    %c0_32 = arith.constant 0 : index
    %54 = vector.load %arg3[%c0_31, %c0_32] : memref<8x256xf32, #tpu.memory_space<vmem>>, vector<8x256xf32>
    tpu.vector_store %arg3[%c0_31, %c0_32], %53 {strides = array<i32>} : memref<8x256xf32, #tpu.memory_space<vmem>>, vector<8x256xf32>,
    return
  }
}

</mosaic_0001>

<llo_original>
// kernel: _lambda_.1
$region0: #{_lambda_.1}
  #allocation0 [shape = 'u32[]', space=smem, size = 0x4, offset = 0x4, fixed_abs, tag = 'smem constant byte address 0x4 - core index']
  #allocation1 [shape = 'u32[72,128]{1,0:T(1,128)}', space=vmem, size = 0x9000, scoped, tag = 'internal scratch']
  #allocation2 [shape = 'f32[16,384]{1,0:T(8,128)}', space=vmem, size = 0x6000, scoped, tag = 'scratch operand']
  %s0 = inlined_call_operand.vmem [shape: f32[16,40], index: 0, kind: input, shape index: {}]
  %s1 = inlined_call_operand.vmem [shape: f32[40,256], index: 1, kind: input, shape index: {}]
  %s2 = inlined_call_operand.vmem [shape: f32[25,256], index: 2, kind: input, shape index: {}]
  %s3 = inlined_call_operand.vmem [shape: f32[8,256], index: 3, kind: output, shape index: {}]
  %s4 = sld [smem:[#allocation0]]
  $region22: #{_lambda_.1} parent=0
    _
  %s6 = ssub.s32 1, %s4
  %s7 = scalar_select 0, %s6, %s4
  // Predicated region
  $region2: #{_lambda_.1} parent=0 // pred_check
    _
  $region3: #{_lambda_.1} parent=0 // pred_check_branch
    %9 = sbr.rel (0) target = $region5
  $region4: #{_lambda_.1} parent=0 // pred_region
    _
  $region5: #{_lambda_.1} parent=0 // pred_fallthru
    _
  // Predicated region
  $region6: #{_lambda_.1} parent=0 // pred_check
    _
  $region7: #{_lambda_.1} parent=0 // pred_check_branch
    %11 = sbr.rel (0) target = $region9
  $region8: #{_lambda_.1} parent=0 // pred_region
    _
  $region9: #{_lambda_.1} parent=0 // pred_fallthru
    _
  // Predicated region
  $region10: #{_lambda_.1} parent=0 // pred_check
    _
  $region11: #{_lambda_.1} parent=0 // pred_check_branch
    %13 = sbr.rel (0) target = $region13
  $region12: #{_lambda_.1} parent=0 // pred_region
    _
  $region13: #{_lambda_.1} parent=0 // pred_fallthru
    _
  %v14 = vld [vmem:[%s2] sm:$0xff]
  %v15 = vld [vmem:[%s2 + $0x10] sm:$0xff]
  %v16 = vld [vmem:[%s2] ss:$0 sm:$0xff]
  %v17 = vld [vmem:[%s2 + $0x20] sm:$0xff]
  %s18 = scalar_lea.vmem %s2, 48
  %v19 = vld [vmem:[%s18] ss:$8 sm:$0x3]
  %v20 = vld [vmem:[%s0] sm:$0xff]
  %v21 = vld [vmem:[%s0 + $0x8] sm:$0xff]
  %v22 = vld [vmem:[%s1] sm:$0xff]
  %v23 = vld [vmem:[%s1 + $0x8] sm:$0xff]
  %v24 = vld [vmem:[%s1 + $0x10] sm:$0xff]
  %v25 = vld [vmem:[%s1 + $0x18] sm:$0xff]
  %v26 = vld [vmem:[%s1 + $0x20] sm:$0xff]
  %v27 = vld [vmem:[%s1 + $0x28] sm:$0xff]
  %v28 = vld [vmem:[%s1 + $0x30] sm:$0xff]
  %v29 = vld [vmem:[%s1 + $0x38] sm:$0xff]
  %v30 = vld [vmem:[%s1 + $0x40] sm:$0xff]
  %v31 = vld [vmem:[%s1 + $0x48] sm:$0xff]
  %vm32 = vcmask 326656
  %v34 = vsel %vm32, %v20, 0
  %v37 = vsel %vm32, %v21, 0
  %39 = vmatpush.msra.mxu0 0.0
  %40 = vmatpush.msra.mxu0 0.0
  %41 = vmatpush.msra.mxu0 0.0
  %42 = vmatpush.msra.mxu0 0.0
  %43 = vmatpush.msra.mxu0 0.0
  %44 = vmatpush.msra.mxu0 0.0
  %45 = vmatpush.msra.mxu0 0.0
  %46 = vmatpush.msra.mxu0 0.0
  %47 = vmatpush.msra.mxu0 0.0
  %48 = vmatpush.msra.mxu0 0.0
  %49 = vmatpush.msra.mxu0 0.0
  %50 = vmatpush.msra.mxu0 %v30
  %51 = vmatpush.msra.mxu0 %v28
  %52 = vmatpush.msra.mxu0 %v26
  %53 = vmatpush.msra.mxu0 %v24
  %54 = vmatpush.msra.mxu0 %v22
  %55 = vmatmul.f32.gmra.mxu0 %v34
  %v56 = vpop.f32.mrf.mxu0
  %v57 = vadd.f32 0.0, %v56
  %58 = vmatmul.f32.gmra.mxu0 %v37
  %v59 = vpop.f32.mrf.mxu0
  %v60 = vadd.f32 0.0, %v59
  %61 = vdwg.mxu0
  %62 = vmatpush.msra.mxu0 0.0
  %63 = vmatpush.msra.mxu0 0.0
  %64 = vmatpush.msra.mxu0 0.0
  %65 = vmatpush.msra.mxu0 0.0
  %66 = vmatpush.msra.mxu0 0.0
  %67 = vmatpush.msra.mxu0 0.0
  %68 = vmatpush.msra.mxu0 0.0
  %69 = vmatpush.msra.mxu0 0.0
  %70 = vmatpush.msra.mxu0 0.0
  %71 = vmatpush.msra.mxu0 0.0
  %72 = vmatpush.msra.mxu0 0.0
  %73 = vmatpush.msra.mxu0 %v31
  %74 = vmatpush.msra.mxu0 %v29
  %75 = vmatpush.msra.mxu0 %v27
  %76 = vmatpush.msra.mxu0 %v25
  %77 = vmatpush.msra.mxu0 %v23
  %78 = vmatmul.f32.gmra.mxu0 %v34
  %v79 = vpop.f32.mrf.mxu0
  %v80 = vadd.f32 0.0, %v79
  %81 = vmatmul.f32.gmra.mxu0 %v37
  %v82 = vpop.f32.mrf.mxu0
  %v83 = vadd.f32 0.0, %v82
  %84 = vdwg.mxu0
  %v85 = vadd.f32 %v57, %v80
  %86 = vadd.xlane.f32.xlu0 %v85
  %v87 = vpop.xlane.xlu0 %86
  %v88 = vadd.f32 %v60, %v83
  %89 = vadd.xlane.f32.xlu0 %v88
  %v90 = vpop.xlane.xlu0 %89
  %v91 = vmul.f32 %v57, %v57
  %v92 = vmul.f32 %v80, %v80
  %v93 = vmul.f32 %v60, %v60
  %v94 = vmul.f32 %v83, %v83
  %v95 = vadd.f32 %v91, %v92
  %96 = vadd.xlane.f32.xlu0 %v95
  %v97 = vpop.xlane.xlu0 %96
  %v98 = vadd.f32 %v93, %v94
  %99 = vadd.xlane.f32.xlu0 %v98
  %v100 = vpop.xlane.xlu0 %99
  %vm101 = vcmask 7168
  %v102 = vsel %vm101, %v87, %v97
  %v103 = vsel %vm101, %v90, %v100
  %vm104 = vcmask 130048
  %v106 = vsel %vm104, %v14, 0
  %v109 = vsel %vm104, %v15, 0
  %111 = vmatpush.msra.mxu0 0.0
  %112 = vmatpush.msra.mxu0 0.0
  %113 = vmatpush.msra.mxu0 0.0
  %114 = vmatpush.msra.mxu0 0.0
  %115 = vmatpush.msra.mxu0 0.0
  %116 = vmatpush.msra.mxu0 0.0
  %117 = vmatpush.msra.mxu0 0.0
  %118 = vmatpush.msra.mxu0 0.0
  %119 = vmatpush.msra.mxu0 0.0
  %120 = vmatpush.msra.mxu0 0.0
  %121 = vmatpush.msra.mxu0 0.0
  %122 = vmatpush.msra.mxu0 0.0
  %123 = vmatpush.msra.mxu0 0.0
  %124 = vmatpush.msra.mxu0 0.0
  %125 = vmatpush.msra.mxu0 %v103
  %126 = vmatpush.msra.mxu0 %v102
  %127 = vmatmul.f32.gmra.mxu0 %v106
  %v128 = vpop.f32.mrf.mxu0
  %v129 = vadd.f32 0.0, %v128
  %130 = vmatmul.f32.gmra.mxu0 %v109
  %v131 = vpop.f32.mrf.mxu0
  %v132 = vadd.f32 0.0, %v131
  %133 = vdwg.mxu0
  %v134 = vmul.f32 %v129, 0.0025510204
  %v135 = vmul.f32 %v132, 0.0025510204
  %v136 = vmul.f32 %v134, %v134
  %v137 = vmul.f32 %v135, %v135
  %140 = vrot.lane.b32.xlu0 %v136, 1
  %v141 = vpop.permute.xlu0 %140
  %142 = vrot.lane.b32.xlu0 %v137, 1
  %v143 = vpop.permute.xlu0 %142
  %v146 = vsub.f32 %v134, %v141
  %v147 = vsub.f32 %v135, %v143
  %v148 = vadd.f32 %v146, 1e-05
  %v149 = vadd.f32 %v147, 1e-05
  %v150 = vrsqrt.pop %v148
  %v151 = vmul.f32 %v150, %v148
  %v152 = vmul.f32 %v151, %v150
  %v153 = vmul.f32 0.5, %v152
  %v154 = vsub.f32 1.5, %v153
  %v155 = vmul.f32 %v150, %v154
  %vm156 = vweird.f32 %v148
  %vm157 = vweird.f32 %v150
  %vm158 = vmor %vm156, %vm157
  %v159 = vsel %vm158, %v150, %v155
  %v160 = vrsqrt.pop %v149
  %v161 = vmul.f32 %v160, %v149
  %v162 = vmul.f32 %v161, %v160
  %v163 = vmul.f32 0.5, %v162
  %v164 = vsub.f32 1.5, %v163
  %v165 = vmul.f32 %v160, %v164
  %vm166 = vweird.f32 %v149
  %vm167 = vweird.f32 %v160
  %vm168 = vmor %vm166, %vm167
  %v169 = vsel %vm168, %v160, %v165
  %172 = vrot.lane.b32.xlu0 %v159, 15
  %v173 = vpop.permute.xlu0 %172
  %174 = vrot.lane.b32.xlu0 %v169, 15
  %v175 = vpop.permute.xlu0 %174
  %v178 = vmul.f32 %v14, %v173
  %v179 = vmul.f32 %v15, %v175
  %182 = vrot.lane.b32.xlu0 %v178, 112
  %v183 = vpop.permute.xlu0 %182
  %184 = vrot.lane.b32.xlu0 %v179, 112
  %v185 = vpop.permute.xlu0 %184
  %v188 = vmul.f32 %v134, %v183
  %v189 = vmul.f32 %v135, %v185
  %192 = vrot.lane.b32.xlu0 %v188, 17
  %v193 = vpop.permute.xlu0 %192
  %194 = vrot.lane.b32.xlu0 %v189, 17
  %v195 = vpop.permute.xlu0 %194
  %v198 = vsub.f32 %v14, %v193
  %v199 = vsub.f32 %v15, %v195
  %200 = vset.pattern.permute.xlu0 16
  %201 = vperm.xlu0 %200, %v178
  %v202 = vpop.permute.xlu0 %201
  %204 = vset.pattern.permute.xlu0 16
  %205 = vperm.xlu0 %204, %v179
  %v206 = vpop.permute.xlu0 %205
  %v208 = vmul.f32 %v57, %v202
  %v209 = vmul.f32 %v80, %v202
  %v210 = vmul.f32 %v60, %v206
  %v211 = vmul.f32 %v83, %v206
  %213 = vset.pattern.permute.xlu0 17
  %214 = vperm.xlu0 %213, %v198
  %v215 = vpop.permute.xlu0 %214
  %218 = vset.pattern.permute.xlu0 17
  %219 = vperm.xlu0 %218, %v199
  %v220 = vpop.permute.xlu0 %219
  %v222 = vadd.f32 %v208, %v215
  %v223 = vadd.f32 %v209, %v215
  %v224 = vadd.f32 %v210, %v220
  %v225 = vadd.f32 %v211, %v220
  %v226 = vmax.f32 %v222, 0.0
  %v227 = vmax.f32 %v223, 0.0
  %v228 = vmax.f32 %v224, 0.0
  %v229 = vmax.f32 %v225, 0.0
  %v231 = vperm.slane %v19, 0
  %v232 = vperm.slane %v19, 1
  %v235 = vmul.f32 %v226, %v231
  %v236 = vmul.f32 %v227, %v232
  %v237 = vmul.f32 %v228, %v231
  %v238 = vmul.f32 %v229, %v232
  %239 = vst [vmem:[#allocation2] sm:$0xff] %v235
  %240 = vst [vmem:[#allocation2 + $0x8] sm:$0xff] %v236
  %241 = vst [vmem:[#allocation2 + $0x18] sm:$0xff] %v237
  %242 = vst [vmem:[#allocation2 + $0x20] sm:$0xff] %v238
  %243 = vst [vmem:[#allocation2 + $0x10] sm:$0xff] 0.0
  %244 = vst [vmem:[#allocation2 + $0x28] sm:$0xff] 0.0
  %v245 = vld [vmem:[#allocation2] sm:$0xff]
  %v246 = vld [vmem:[#allocation2 + $0x8] sm:$0xff]
  %v247 = vld [vmem:[#allocation2 + $0x18] sm:$0xff]
  %v248 = vld [vmem:[#allocation2 + $0x20] sm:$0xff]
  %v249 = vld [vmem:[#allocation2] sm:$0xff]
  %v250 = vld [vmem:[#allocation2 + $0x8] sm:$0xff]
  %v251 = vld [vmem:[#allocation2 + $0x10] sm:$0xff]
  %v252 = vld [vmem:[#allocation2 + $0x18] sm:$0xff]
  %v253 = vld [vmem:[#allocation2 + $0x20] sm:$0xff]
  %v254 = vld [vmem:[#allocation2 + $0x28] sm:$0xff]
  %261 = vrot.lane.b32.xlu0 %v249, 127
  %v262 = vpop.permute.xlu0 %261
  %263 = vrot.lane.b32.xlu0 %v250, 127
  %v264 = vpop.permute.xlu0 %263
  %265 = vrot.lane.b32.xlu0 %v251, 127
  %v266 = vpop.permute.xlu0 %265
  %267 = vrot.lane.b32.xlu0 %v252, 127
  %v268 = vpop.permute.xlu0 %267
  %269 = vrot.lane.b32.xlu0 %v253, 127
  %v270 = vpop.permute.xlu0 %269
  %271 = vrot.lane.b32.xlu0 %v254, 127
  %v272 = vpop.permute.xlu0 %271
  %vm273 = vcmask 1039360
  %v274 = vsel %vm273, %v262, %v264
  %v275 = vsel %vm273, %v264, %v266
  %v276 = vsel %vm273, %v268, %v270
  %v277 = vsel %vm273, %v270, %v272
  %282 = vrot.lane.b32.xlu0 %v249, 113
  %v283 = vpop.permute.xlu0 %282
  %284 = vrot.lane.b32.xlu0 %v250, 113
  %v285 = vpop.permute.xlu0 %284
  %286 = vrot.lane.b32.xlu0 %v251, 113
  %v287 = vpop.permute.xlu0 %286
  %288 = vrot.lane.b32.xlu0 %v252, 113
  %v289 = vpop.permute.xlu0 %288
  %290 = vrot.lane.b32.xlu0 %v253, 113
  %v291 = vpop.permute.xlu0 %290
  %292 = vrot.lane.b32.xlu0 %v254, 113
  %v293 = vpop.permute.xlu0 %292
  %vm294 = vcmask 924672
  %v295 = vsel %vm294, %v283, %v285
  %v296 = vsel %vm294, %v285, %v287
  %v297 = vsel %vm294, %v289, %v291
  %v298 = vsel %vm294, %v291, %v293
  %303 = vrot.lane.b32.xlu0 %v249, 112
  %v304 = vpop.permute.xlu0 %303
  %305 = vrot.lane.b32.xlu0 %v250, 112
  %v306 = vpop.permute.xlu0 %305
  %307 = vrot.lane.b32.xlu0 %v251, 112
  %v308 = vpop.permute.xlu0 %307
  %309 = vrot.lane.b32.xlu0 %v252, 112
  %v310 = vpop.permute.xlu0 %309
  %311 = vrot.lane.b32.xlu0 %v253, 112
  %v312 = vpop.permute.xlu0 %311
  %313 = vrot.lane.b32.xlu0 %v254, 112
  %v314 = vpop.permute.xlu0 %313
  %vm315 = vcmask 916480
  %v316 = vsel %vm315, %v304, %v306
  %v317 = vsel %vm315, %v306, %v308
  %v318 = vsel %vm315, %v310, %v312
  %v319 = vsel %vm315, %v312, %v314
  %325 = vset.pattern.permute.xlu0 18
  %326 = vperm.xlu0 %325, %v16
  %v327 = vpop.permute.xlu0 %326
  %vm329 = vcmask 523264
  %v331 = vsel %vm329, %v17, 0
  %333 = vmatpush.msra.mxu0 0.0
  %334 = vmatpush.msra.mxu0 0.0
  %335 = vmatpush.msra.mxu0 0.0
  %336 = vmatpush.msra.mxu0 0.0
  %337 = vmatpush.msra.mxu0 0.0
  %338 = vmatpush.msra.mxu0 0.0
  %339 = vmatpush.msra.mxu0 0.0
  %340 = vmatpush.msra.mxu0 0.0
  %341 = vmatpush.msra.mxu0 %v318
  %342 = vmatpush.msra.mxu0 %v316
  %343 = vmatpush.msra.mxu0 %v297
  %344 = vmatpush.msra.mxu0 %v295
  %345 = vmatpush.msra.mxu0 %v276
  %346 = vmatpush.msra.mxu0 %v274
  %347 = vmatpush.msra.mxu0 %v247
  %348 = vmatpush.msra.mxu0 %v245
  %349 = vmatmul.f32.gmra.mxu0 %v331
  %v350 = vpop.f32.mrf.mxu0
  %v351 = vadd.f32 %v327, %v350
  %352 = vdwg.mxu0
  %353 = vmatpush.msra.mxu0 0.0
  %354 = vmatpush.msra.mxu0 0.0
  %355 = vmatpush.msra.mxu0 0.0
  %356 = vmatpush.msra.mxu0 0.0
  %357 = vmatpush.msra.mxu0 0.0
  %358 = vmatpush.msra.mxu0 0.0
  %359 = vmatpush.msra.mxu0 0.0
  %360 = vmatpush.msra.mxu0 0.0
  %361 = vmatpush.msra.mxu0 %v319
  %362 = vmatpush.msra.mxu0 %v317
  %363 = vmatpush.msra.mxu0 %v298
  %364 = vmatpush.msra.mxu0 %v296
  %365 = vmatpush.msra.mxu0 %v277
  %366 = vmatpush.msra.mxu0 %v275
  %367 = vmatpush.msra.mxu0 %v248
  %368 = vmatpush.msra.mxu0 %v246
  %369 = vmatmul.f32.gmra.mxu0 %v331
  %v370 = vpop.f32.mrf.mxu0
  %v371 = vadd.f32 %v327, %v370
  %372 = vdwg.mxu0
  %v373 = vmul.f32 %v351, 0.5
  %v374 = vmul.f32 %v371, 0.5
  %v375 = vtanh.pop %v373
  %v376 = vtanh.pop %v374
  %v377 = vmul.f32 %v375, 0.5
  %v378 = vmul.f32 %v376, 0.5
  %v379 = vadd.f32 %v377, 0.5
  %v380 = vadd.f32 %v378, 0.5
  %381 = vst [vmem:[%s3] sm:$0xff] %v379
  %382 = vst [vmem:[%s3 + $0x8] sm:$0xff] %v380
  // Predicated region
  $region14: #{_lambda_.1} parent=0 // pred_check
    _
  $region15: #{_lambda_.1} parent=0 // pred_check_branch
    %384 = sbr.rel (0) target = $region17
  $region16: #{_lambda_.1} parent=0 // pred_region
    _
  $region17: #{_lambda_.1} parent=0 // pred_fallthru
    _
  // Predicated region
  $region18: #{_lambda_.1} parent=0 // pred_check
    _
  $region19: #{_lambda_.1} parent=0 // pred_check_branch
    %386 = sbr.rel (0) target = $region21
  $region20: #{_lambda_.1} parent=0 // pred_region
    _
  $region21: #{_lambda_.1} parent=0 // pred_fallthru
    _

</llo_original>
